<compile_context>
chip_gen: v5e
topology: v5e:2x2
jax: 0.10.0
libtpu: 0.0.40
codegen_flags: <defaults>
</compile_context>

<pallas_src>
import functools

import jax
import jax.numpy as jnp
from jax import lax
from jax.experimental import pallas as pl
from jax.experimental.pallas import tpu as pltpu

KSIZE = 4
STRIDE = 2
PAD = 1
EPS = 1e-5
NEG_SLOPE = 0.2

_TM_TARGET = 2048                       # row-tile target (rows of N*Ho*Wo)
_TK = 512                               # K (= Cin*16) tile
_VMEM_BUDGET = 36 * 1024 * 1024         # est. pass-1 working-set cap (v7x: 64 MiB VMEM)
_VMEM_LIMIT = 48 * 1024 * 1024          # scoped VMEM limit handed to Mosaic
_W_RESIDENT_MAX = 8 * 1024 * 1024       # keep full weight resident below this


def _round_up(x, m):
    return (x + m - 1) // m * m


def _cdiv(a, b):
    return (a + b - 1) // b


# ----------------------------------------------------------------------------
# Pass 1: tiled conv matmul (f32 MXU accumulation) + per-tile BN statistics.
#   y out-spec is k-invariant (resident across the K reduction); stats are
#   emitted from the f32 accumulation *before* the (optional) bf16 cast.
# ----------------------------------------------------------------------------
def _conv_stats_kernel(p_ref, w_ref, y_ref, ssum_ref, ssq_ref, *acc_ref,
                       tk, slice_w):
    k = pl.program_id(1)
    nk = pl.num_programs(1)

    if slice_w:
        # Full (Kp, Cp) weight resident in VMEM; take this K tile in-kernel.
        w = w_ref[pl.ds(pl.multiple_of(k * tk, 128), tk), :]
    else:
        # Weight block already (tk, Cp) (nk == 1, or streamed fallback).
        w = w_ref[...]

    part = jnp.dot(p_ref[...], w, preferred_element_type=jnp.float32)

    def _emit(y):
        y_ref[...] = y.astype(y_ref.dtype)
        ssum_ref[...] = jnp.sum(y, axis=0, keepdims=True)[None]
        ssq_ref[...] = jnp.sum(y * y, axis=0, keepdims=True)[None]

    if not acc_ref:                    # nk == 1: no scratch accumulator at all
        _emit(part)
    else:                              # nk > 1: f32 scratch across K tiles
        acc = acc_ref[0]

        @pl.when(k == 0)
        def _():
            acc[...] = part

        @pl.when(jnp.logical_and(k > 0, k < nk - 1))
        def _():
            acc[...] += part

        @pl.when(k == nk - 1)
        def _():
            _emit(acc[...] + part)     # fold last partial -> skip store+reload


# ----------------------------------------------------------------------------
# Pass 2: fused scale/shift (BN affine folded in the wrapper) + LeakyReLU(0.2),
#         with a per-tile transpose so the output is channel-major (NCHW-ready).
# ----------------------------------------------------------------------------
def _bn_lrelu_kernel(y_ref, scale_ref, shift_ref, o_ref):
    yn = y_ref[0].astype(jnp.float32) * scale_ref[...] + shift_ref[...]
    yn = jnp.where(yn > 0, yn, NEG_SLOPE * yn)
    o_ref[0] = yn.T                    # (TM, Cp) -> (Cp, TM): XLU, lane-dense


# ----------------------------------------------------------------------------
# Wrapper
# ----------------------------------------------------------------------------
def _im2col(xp, Ho, Wo, dtype):
    # xp: (N, Cin, Hp, Wp) reflect-padded -> (N, Ho*Wo, Cin*16)
    N, Cin, _, _ = xp.shape
    cols = []
    for ki in range(KSIZE):
        for kj in range(KSIZE):
            cols.append(
                xp[:, :,
                   ki:ki + STRIDE * (Ho - 1) + 1:STRIDE,
                   kj:kj + STRIDE * (Wo - 1) + 1:STRIDE])   # (N, Cin, Ho, Wo)
    patches = jnp.stack(cols, axis=2).astype(dtype)          # (N,Cin,16,Ho,Wo)
    patches = patches.transpose(0, 3, 4, 1, 2)               # (N,Ho,Wo,Cin,16)
    return patches.reshape(N, Ho * Wo, Cin * KSIZE * KSIZE)


def dconv_block(x, weight, bias, gamma, beta, *, compute_dtype=jnp.bfloat16):
    """x: (N, Cin, H, W) f32; weight: (Cout, Cin, 4, 4). Returns NCHW f32."""
    del bias  # Conv bias cancels exactly under train-mode BatchNorm (mean sub).
    N, Cin, H, W = x.shape
    Cout = weight.shape[0]
    Ho = (H + 2 * PAD - KSIZE) // STRIDE + 1
    Wo = (W + 2 * PAD - KSIZE) // STRIDE + 1
    HoWo = Ho * Wo
    M = N * HoWo
    K = Cin * KSIZE * KSIZE

    ebytes = jnp.dtype(compute_dtype).itemsize
    y_dtype = (jnp.float32 if jnp.dtype(compute_dtype) == jnp.float32
               else jnp.bfloat16)
    ybytes = jnp.dtype(y_dtype).itemsize

    # Lane-dense padded sizes (Cout, K padded to 128 multiples; no extra
    # padding beyond 128 — the kernel is HBM-bound, not MXU-bound).
    Cp = _round_up(Cout, 128)
    Kp = _round_up(K, 128)
    if Kp > _TK:
        TK = _TK
        Kp = _round_up(Kp, TK)
    else:
        TK = Kp
    nk = Kp // TK
    w_resident = (Kp * Cp * ebytes) <= _W_RESIDENT_MAX or nk == 1

    # ---- pass-1 row tile: as large as the VMEM budget allows ---------------
    def p1_vmem(tm):
        b = 2 * tm * TK * ebytes                           # patches (2 bufs)
        b += 2 * (Kp if w_resident else TK) * Cp * ebytes  # weight
        b += 2 * tm * Cp * ybytes                          # y out (2 bufs)
        if nk > 1:
            b += tm * Cp * 4                               # f32 accumulator
        return b

    TM = min(_TM_TARGET, _round_up(HoWo, 128))
    while p1_vmem(TM) > _VMEM_BUDGET and TM > 128:
        TM -= 128
    if N * _cdiv(HoWo, TM) < 2:          # make sure both v7x TCs get work
        TM = max(128, _round_up(_cdiv(HoWo, 2), 128))

    # Per-image padded row count: tiles never straddle images, so pass 2 can
    # emit a channel-major (N, Cp, HoWo_p) output directly.
    HoWo_p = _round_up(HoWo, TM)
    n_j = HoWo_p // TM
    Mp = N * HoWo_p
    nm = N * n_j

    # ---- wrapper-side im2col (zero-padded rows/cols contribute exact zeros) -
    xp = jnp.pad(x, ((0, 0), (0, 0), (PAD, PAD), (PAD, PAD)), mode="reflect")
    patches = _im2col(xp, Ho, Wo, compute_dtype)              # (N, HoWo, K)
    patches = jnp.pad(patches, ((0, 0), (0, HoWo_p - HoWo), (0, Kp - K)))
    patches = patches.reshape(Mp, Kp)

    wmat = jnp.pad(weight.reshape(Cout, K).T.astype(compute_dtype),
                   ((0, Kp - K), (0, Cp - Cout)))             # (Kp, Cp)

    if w_resident:
        w_spec = pl.BlockSpec((Kp, Cp), lambda i, k: (0, 0))  # VMEM-resident
    else:
        w_spec = pl.BlockSpec((TK, Cp), lambda i, k: (k, 0))  # streamed

    kernel1 = functools.partial(_conv_stats_kernel, tk=TK,
                                slice_w=(w_resident and nk > 1))

    cost1 = pl.CostEstimate(
        flops=2 * Mp * Kp * Cp,
        transcendentals=0,
        bytes_accessed=(Mp * Kp * ebytes
                        + (1 if w_resident else nm) * Kp * Cp * ebytes
                        + Mp * Cp * ybytes + 2 * nm * Cp * 4))

    y, ssum, ssq = pl.pallas_call(
        kernel1,
        out_shape=(jax.ShapeDtypeStruct((Mp, Cp), y_dtype),
                   jax.ShapeDtypeStruct((nm, 1, Cp), jnp.float32),
                   jax.ShapeDtypeStruct((nm, 1, Cp), jnp.float32)),
        grid_spec=pltpu.PrefetchScalarGridSpec(
            num_scalar_prefetch=0,
            grid=(nm, nk),
            in_specs=[
                pl.BlockSpec((TM, TK), lambda i, k: (i, k)),
                w_spec,
            ],
            out_specs=(
                pl.BlockSpec((TM, Cp), lambda i, k: (i, 0)),
                pl.BlockSpec((1, 1, Cp), lambda i, k: (i, 0, 0)),
                pl.BlockSpec((1, 1, Cp), lambda i, k: (i, 0, 0)),
            ),
            scratch_shapes=([pltpu.VMEM((TM, Cp), jnp.float32)]
                            if nk > 1 else [])),
        compiler_params=pltpu.CompilerParams(
            dimension_semantics=("parallel", "arbitrary"),
            vmem_limit_bytes=_VMEM_LIMIT),
        cost_estimate=cost1,
    )(patches, wmat)

    # ---- tiny Cp-sized stats combine + BN affine fold (plain XLA) ----------
    ssum_g = jnp.sum(ssum, axis=0)                            # (1, Cp)
    ssq_g = jnp.sum(ssq, axis=0)                              # (1, Cp)
    inv_m = 1.0 / M                                           # true row count
    mean = ssum_g * inv_m
    var = jnp.maximum(ssq_g * inv_m - mean * mean, 0.0)       # guard cancel.
    g2 = jnp.pad(gamma.astype(jnp.float32).reshape(1, Cout),
                 ((0, 0), (0, Cp - Cout)))
    b2 = jnp.pad(beta.astype(jnp.float32).reshape(1, Cout),
                 ((0, 0), (0, Cp - Cout)))
    scale = g2 * lax.rsqrt(var + EPS)                         # (1, Cp)
    shift = b2 - mean * scale                                 # (1, Cp)

    # ---- pass 2: scale/shift + LeakyReLU, channel-major output -------------
    y3 = y.reshape(N, HoWo_p, Cp)      # metadata-only reshape

    cost2 = pl.CostEstimate(
        flops=4 * Mp * Cp,
        transcendentals=0,
        bytes_accessed=Mp * Cp * ybytes + Mp * Cp * 4 + 4 * Cp * 4)

    out_cm = pl.pallas_call(
        _bn_lrelu_kernel,
        out_shape=jax.ShapeDtypeStruct((N, Cp, HoWo_p), jnp.float32),
        grid_spec=pltpu.PrefetchScalarGridSpec(
            num_scalar_prefetch=0,
            grid=(N, n_j),
            in_specs=[
                pl.BlockSpec((1, TM, Cp), lambda n, j: (n, j, 0)),
                pl.BlockSpec((1, Cp), lambda n, j: (0, 0)),
                pl.BlockSpec((1, Cp), lambda n, j: (0, 0)),
            ],
            out_specs=pl.BlockSpec((1, Cp, TM), lambda n, j: (n, 0, j))),
        compiler_params=pltpu.CompilerParams(
            dimension_semantics=("parallel", "parallel"),
            vmem_limit_bytes=_VMEM_LIMIT),
        cost_estimate=cost2,
    )(y3, scale, shift)

    # Channel-major -> NCHW: slice off padding (no-op when Cout % 128 == 0 and
    # Ho*Wo % TM == 0) and reshape — no full-array HBM transpose.
    return out_cm[:, :Cout, :HoWo].reshape(N, Cout, Ho, Wo)


# ----------------------------------------------------------------------------
# Pure-JAX reference matching PyTorch semantics (train-mode BN, with bias).
# ----------------------------------------------------------------------------
def dconv_block_ref(x, weight, bias, gamma, beta):
    xp = jnp.pad(x, ((0, 0), (0, 0), (PAD, PAD), (PAD, PAD)), mode="reflect")
    y = lax.conv_general_dilated(
        xp, weight, window_strides=(STRIDE, STRIDE), padding="VALID",
        dimension_numbers=("NCHW", "OIHW", "NCHW"))
    y = y + bias.reshape(1, -1, 1, 1)
    mean = jnp.mean(y, axis=(0, 2, 3), keepdims=True)
    var = jnp.mean((y - mean) ** 2, axis=(0, 2, 3), keepdims=True)
    yn = (y - mean) * lax.rsqrt(var + EPS)
    yn = yn * gamma.reshape(1, -1, 1, 1) + beta.reshape(1, -1, 1, 1)
    return jnp.where(yn > 0, yn, NEG_SLOPE * yn)


if __name__ == "__main__":
    key = jax.random.PRNGKey(0)
    k_x, k_w, k_b, k_g, k_be = jax.random.split(key, 5)

    N, Cin, H, W = 2, 4, 16, 16
    Cout = 8

    x = jax.random.normal(k_x, (N, Cin, H, W), dtype=jnp.float32)
    fan_in = Cin * KSIZE * KSIZE
    bound = 1.0 / (fan_in ** 0.5)
    weight = jax.random.uniform(k_w, (Cout, Cin, KSIZE, KSIZE),
                                minval=-bound, maxval=bound, dtype=jnp.float32)
    bias = jax.random.uniform(k_b, (Cout,), minval=-bound, maxval=bound,
                              dtype=jnp.float32)
    gamma = 1.0 + 0.1 * jax.random.normal(k_g, (Cout,), dtype=jnp.float32)
    beta = 0.1 * jax.random.normal(k_be, (Cout,), dtype=jnp.float32)

    ref = jax.block_until_ready(dconv_block_ref(x, weight, bias, gamma, beta))

    # f32 matmul + f32 intermediate path: tight numerical check.
    fwd_f32 = jax.jit(functools.partial(dconv_block, compute_dtype=jnp.float32))
    out_f32 = jax.block_until_ready(fwd_f32(x, weight, bias, gamma, beta))
    assert out_f32.shape == (N, Cout, H // 2, W // 2), out_f32.shape
    assert jnp.allclose(out_f32, ref, atol=1e-4, rtol=1e-4), float(
        jnp.max(jnp.abs(out_f32 - ref)))

    # bf16 matmul + bf16 intermediate path (perf default): looser tolerance.
    fwd_bf16 = jax.jit(functools.partial(dconv_block,
                                         compute_dtype=jnp.bfloat16))
    out_bf16 = jax.block_until_ready(fwd_bf16(x, weight, bias, gamma, beta))
    assert out_bf16.shape == (N, Cout, H // 2, W // 2), out_bf16.shape
    assert jnp.allclose(out_bf16, ref, atol=8e-2, rtol=5e-2), float(
        jnp.max(jnp.abs(out_bf16 - ref)))

    print("KERNEL_OK")
</pallas_src>

<mosaic_0001>
module attributes {stable_mosaic.version = 11 : i64} {
  func.func @_conv_stats_kernel(%arg0: i32, %arg1: i32, %arg2: memref<128x128xf32, #tpu.memory_space<vmem>>, %arg3: memref<128x128xf32, #tpu.memory_space<vmem>>, %arg4: memref<128x128xf32, #tpu.memory_space<vmem>>, %arg5: memref<1x1x128xf32, #tpu.memory_space<vmem>>, %arg6: memref<1x1x128xf32, #tpu.memory_space<vmem>>) attributes {dimension_semantics = [#tpu.dimension_semantics<parallel>, #tpu.dimension_semantics<arbitrary>], iteration_bounds = array<i64: 2, 1>, scalar_prefetch = 0 : i64, scratch_operands = 0 : i64, tpu.core_type = #tpu.core_type<tc>, window_params = [{transform_indices = @transform_0, window_bounds = array<i64: 128, 128>}, {pipeline_mode = #tpu.pipeline_mode<synchronous>, transform_indices = @transform_1, window_bounds = array<i64: 128, 128>}, {transform_indices = @transform_2, window_bounds = array<i64: 128, 128>}, {transform_indices = @transform_3, window_bounds = array<i64: 1, 1, 128>}, {transform_indices = @transform_4, window_bounds = array<i64: 1, 1, 128>}]} {
    %c0 = arith.constant 0 : index
    %c0_0 = arith.constant 0 : index
    %0 = vector.load %arg3[%c0, %c0_0] : memref<128x128xf32, #tpu.memory_space<vmem>>, vector<128x128xf32>
    %c0_1 = arith.constant 0 : index
    %c0_2 = arith.constant 0 : index
    %1 = vector.load %arg2[%c0_1, %c0_2] : memref<128x128xf32, #tpu.memory_space<vmem>>, vector<128x128xf32>
    %cst = arith.constant dense<0.000000e+00> : vector<128x128xf32>
    %2 = tpu.matmul %1, %0, %cst {dimension_numbers = #tpu.dot_dimension_numbers<[1], [0], [0], [1], [0, 0, 1, 1], [], []>} : vector<128x128xf32>, vector<128x128xf32>, vector<128x128xf32> -> vector<128x128xf32>
    %c0_3 = arith.constant 0 : index
    %c0_4 = arith.constant 0 : index
    %3 = vector.load %arg4[%c0_3, %c0_4] : memref<128x128xf32, #tpu.memory_space<vmem>>, vector<128x128xf32>
    tpu.vector_store %arg4[%c0_3, %c0_4], %2 {strides = array<i32>} : memref<128x128xf32, #tpu.memory_space<vmem>>, vector<128x128xf32>,
    %cst_5 = arith.constant dense<0.000000e+00> : vector<128xf32>
    %4 = vector.multi_reduction <add>, %2, %cst_5 [0] : vector<128x128xf32> to vector<128xf32>
    %5 = vector.shape_cast %4 : vector<128xf32> to vector<1x128xf32>
    %6 = vector.shape_cast %5 : vector<1x128xf32> to vector<1x1x128xf32>
    %c0_6 = arith.constant 0 : index
    %c0_7 = arith.constant 0 : index
    %c0_8 = arith.constant 0 : index
    %7 = vector.load %arg5[%c0_6, %c0_7, %c0_8] : memref<1x1x128xf32, #tpu.memory_space<vmem>>, vector<1x1x128xf32>
    tpu.vector_store %arg5[%c0_6, %c0_7, %c0_8], %6 {strides = array<i32>} : memref<1x1x128xf32, #tpu.memory_space<vmem>>, vector<1x1x128xf32>,
    %8 = arith.mulf %2, %2 : vector<128x128xf32>
    %cst_9 = arith.constant dense<0.000000e+00> : vector<128xf32>
    %9 = vector.multi_reduction <add>, %8, %cst_9 [0] : vector<128x128xf32> to vector<128xf32>
    %10 = vector.shape_cast %9 : vector<128xf32> to vector<1x128xf32>
    %11 = vector.shape_cast %10 : vector<1x128xf32> to vector<1x1x128xf32>
    %c0_10 = arith.constant 0 : index
    %c0_11 = arith.constant 0 : index
    %c0_12 = arith.constant 0 : index
    %12 = vector.load %arg6[%c0_10, %c0_11, %c0_12] : memref<1x1x128xf32, #tpu.memory_space<vmem>>, vector<1x1x128xf32>
    tpu.vector_store %arg6[%c0_10, %c0_11, %c0_12], %11 {strides = array<i32>} : memref<1x1x128xf32, #tpu.memory_space<vmem>>, vector<1x1x128xf32>,
    return
  }
  func.func @transform_0(%arg0: i32, %arg1: i32) -> (i32, i32) {
    %c0_i32 = arith.constant 0 : i32
    return %arg0, %arg1 : i32, i32
  }
  func.func @transform_1(%arg0: i32, %arg1: i32) -> (i32, i32) {
    %c0_i32 = arith.constant 0 : i32
    %c0_i32_0 = arith.constant 0 : i32
    %c0_i32_1 = arith.constant 0 : i32
    return %c0_i32, %c0_i32_0 : i32, i32
  }
  func.func @transform_2(%arg0: i32, %arg1: i32) -> (i32, i32) {
    %c0_i32 = arith.constant 0 : i32
    %c0_i32_0 = arith.constant 0 : i32
    return %arg0, %c0_i32 : i32, i32
  }
  func.func @transform_3(%arg0: i32, %arg1: i32) -> (i32, i32, i32) {
    %c0_i32 = arith.constant 0 : i32
    %c0_i32_0 = arith.constant 0 : i32
    %c0_i32_1 = arith.constant 0 : i32
    return %arg0, %c0_i32, %c0_i32_0 : i32, i32, i32
  }
  func.func @transform_4(%arg0: i32, %arg1: i32) -> (i32, i32, i32) {
    %c0_i32 = arith.constant 0 : i32
    %c0_i32_0 = arith.constant 0 : i32
    %c0_i32_1 = arith.constant 0 : i32
    return %arg0, %c0_i32, %c0_i32_0 : i32, i32, i32
  }
}

module attributes {stable_mosaic.version = 11 : i64} {
  func.func @_bn_lrelu_kernel(%arg0: i32, %arg1: i32, %arg2: memref<1x128x128xf32, #tpu.memory_space<vmem>>, %arg3: memref<1x128xf32, #tpu.memory_space<vmem>>, %arg4: memref<1x128xf32, #tpu.memory_space<vmem>>, %arg5: memref<1x128x128xf32, #tpu.memory_space<vmem>>) attributes {dimension_semantics = [#tpu.dimension_semantics<parallel>, #tpu.dimension_semantics<parallel>], iteration_bounds = array<i64: 2, 1>, scalar_prefetch = 0 : i64, scratch_operands = 0 : i64, tpu.core_type = #tpu.core_type<tc>, window_params = [{transform_indices = @transform_0, window_bounds = array<i64: 1, 128, 128>}, {pipeline_mode = #tpu.pipeline_mode<synchronous>, transform_indices = @transform_1, window_bounds = array<i64: 1, 128>}, {pipeline_mode = #tpu.pipeline_mode<synchronous>, transform_indices = @transform_2, window_bounds = array<i64: 1, 128>}, {transform_indices = @transform_3, window_bounds = array<i64: 1, 128, 128>}]} {
    %c0 = arith.constant 0 : index
    %c0_0 = arith.constant 0 : index
    %c0_1 = arith.constant 0 : index
    %0 = vector.load %arg2[%c0, %c0_0, %c0_1] : memref<1x128x128xf32, #tpu.memory_space<vmem>>, vector<1x128x128xf32>
    %1 = vector.shape_cast %0 : vector<1x128x128xf32> to vector<128x128xf32>
    %c0_2 = arith.constant 0 : index
    %c0_3 = arith.constant 0 : index
    %2 = vector.load %arg3[%c0_2, %c0_3] : memref<1x128xf32, #tpu.memory_space<vmem>>, vector<1x128xf32>
    %3 = vector.broadcast %2 : vector<1x128xf32> to vector<128x128xf32>
    %4 = arith.mulf %1, %3 : vector<128x128xf32>
    %c0_4 = arith.constant 0 : index
    %c0_5 = arith.constant 0 : index
    %5 = vector.load %arg4[%c0_4, %c0_5] : memref<1x128xf32, #tpu.memory_space<vmem>>, vector<1x128xf32>
    %6 = vector.broadcast %5 : vector<1x128xf32> to vector<128x128xf32>
    %7 = arith.addf %4, %6 : vector<128x128xf32>
    %cst = arith.constant 0.000000e+00 : f32
    %8 = vector.broadcast %cst : f32 to vector<128x128xf32>
    %9 = arith.cmpf ogt, %7, %8 : vector<128x128xf32>
    %cst_6 = arith.constant 2.000000e-01 : f32
    %10 = vector.broadcast %cst_6 : f32 to vector<128x128xf32>
    %11 = arith.mulf %10, %7 : vector<128x128xf32>
    %12 = arith.select %9, %7, %11 : vector<128x128xi1>, vector<128x128xf32>
    %13 = tpu.transpose %12, [1, 0] : vector<128x128xf32> -> vector<128x128xf32>
    %c0_7 = arith.constant 0 : index
    %c0_8 = arith.constant 0 : index
    %c0_9 = arith.constant 0 : index
    %14 = vector.load %arg5[%c0_7, %c0_8, %c0_9] : memref<1x128x128xf32, #tpu.memory_space<vmem>>, vector<1x128x128xf32>
    %15 = vector.shape_cast %14 : vector<1x128x128xf32> to vector<128x128xf32>
    %16 = vector.shape_cast %13 : vector<128x128xf32> to vector<1x128x128xf32>
    tpu.vector_store %arg5[%c0_7, %c0_8, %c0_9], %16 {strides = array<i32>} : memref<1x128x128xf32, #tpu.memory_space<vmem>>, vector<1x128x128xf32>,
    return
  }
  func.func @transform_0(%arg0: i32, %arg1: i32) -> (i32, i32, i32) {
    %c0_i32 = arith.constant 0 : i32
    %c0_i32_0 = arith.constant 0 : i32
    return %arg0, %arg1, %c0_i32 : i32, i32, i32
  }
  func.func @transform_1(%arg0: i32, %arg1: i32) -> (i32, i32) {
    %c0_i32 = arith.constant 0 : i32
    %c0_i32_0 = arith.constant 0 : i32
    %c0_i32_1 = arith.constant 0 : i32
    return %c0_i32, %c0_i32_0 : i32, i32
  }
  func.func @transform_2(%arg0: i32, %arg1: i32) -> (i32, i32) {
    %c0_i32 = arith.constant 0 : i32
    %c0_i32_0 = arith.constant 0 : i32
    %c0_i32_1 = arith.constant 0 : i32
    return %c0_i32, %c0_i32_0 : i32, i32
  }
  func.func @transform_3(%arg0: i32, %arg1: i32) -> (i32, i32, i32) {
    %c0_i32 = arith.constant 0 : i32
    %c0_i32_0 = arith.constant 0 : i32
    return %arg0, %c0_i32, %arg1 : i32, i32, i32
  }
}

</mosaic_0001>

<llo_original>
// kernel: dconv_block.3
$region0: #{dconv_block.3}
  #allocation0 [shape = 'u32[]', space=smem, size = 0x4, offset = 0x4, fixed_abs, tag = 'smem constant byte address 0x4 - core index']
  #allocation1 [shape = 'u32[72,128]{1,0:T(1,128)}', space=vmem, size = 0x9000, scoped, tag = 'internal scratch']
  %s0 = inlined_call_operand.vmem [shape: f32[2,128,128], index: 0, kind: input, shape index: {}]
  %s1 = inlined_call_operand.vmem [shape: f32[1,128], index: 1, kind: input, shape index: {}]
  %s2 = inlined_call_operand.vmem [shape: f32[1,128], index: 2, kind: input, shape index: {}]
  %s3 = inlined_call_operand.vmem [shape: f32[2,128,128], index: 3, kind: output, shape index: {}]
  %s4 = sld [smem:[#allocation0]]
  $region45: #{dconv_block.3} parent=0
    _
  %s6 = ssub.s32 1, %s4
  %s7 = scalar_select 0, %s6, %s4
  loop: start=0, step=1, limit=4
  $region2: #{dconv_block.3} parent=0 // loop_pre_header
    _
  $region3: #{dconv_block.3} parent=0 // loop_header
    %s9 = sphi 0, %s13
    %p10 = scmp.ge.s32.totalorder %s9, 4
    %s16 = sphi 0, %s28
    %s17 = sphi 0, %s24
    %s18 = sphi 0, %s16
    %s19 = sphi 0, %s17
    %s20 = sphi 0, %s18
    %s21 = sphi 0, %s19
    %s33 = sphi 0, %s35
    %s36 = sphi 0, %s33
    %s37 = sphi 0, %s36
    %s53 = sphi 0, %s37
    %s57 = sphi 0, %s57
    %s59 = sphi 0, %s57
    %s60 = sphi 0, %s59
    %s74 = sphi 0, %s60
    %s78 = sphi 0, %s78
    %s80 = sphi 0, %s78
    %s81 = sphi 0, %s80
    %s95 = sphi 0, %s81
    %s103 = sphi 0, %s105
    %s106 = sphi 0, %s103
    %s107 = sphi 0, %s106
    %s123 = sphi 0, %s107
  $region4: #{dconv_block.3} parent=0 // loop_header_branch
    %12 = sbr.rel (%p10) target = $region8
  $region5: #{dconv_block.3} parent=0 // loop_body
    %s14 = ssub.s32 %s9, 1
    %s15 = ssub.s32 %s9, 2
    %s22 = sadd.s32 1, %s17
    %p23 = scmp.ge.s32.totalorder %s22, 1
    %s24 = scalar_select %p23, 0, %s22
    %s25 = sadd.s32 1, %s16
    %s26 = scalar_select %p23, %s25, %s16
    %p27 = scmp.ge.s32.totalorder %s26, 2
    %s28 = scalar_select %p27, 0, %s26
    %s29 = ssub.s32 %s16, %s28
    %s30 = ssub.s32 %s17, %s24
    %s31 = sor.u32 %s29, %s30
    %p32 = scmp.eq.s32.totalorder %s31, 0
    %s34 = sadd.s32 %s33, 1
    %s35 = scalar_select %p32, %s33, %s34
    %p38 = pneg %p32
    %p39 = scmp.eq.s32.totalorder %s9, 1
    %p40 = por %p38, %p39
    %p41 = scmp.ne.s32.totalorder %s33, %s36
    %p42 = scmp.eq.s32.totalorder %s9, 0
    %p43 = por %p41, %p42
    %p44 = scmp.ne.s32.totalorder %s33, %s36
    %p45 = scmp.eq.s32.totalorder %s14, 1
    %p46 = por %p44, %p45
    %p47 = scmp.ne.s32.totalorder %s36, %s37
    %p48 = scmp.eq.s32.totalorder %s14, 0
    %p49 = por %p47, %p48
    %p50 = scmp.ne.s32.totalorder %s36, %s37
    %p51 = scmp.eq.s32.totalorder %s15, 1
    %p52 = por %p50, %p51
    %p54 = scmp.ne.s32.totalorder %s37, %s53
    %p55 = scmp.eq.s32.totalorder %s15, 0
    %p56 = por %p54, %p55
    %s58 = sadd.s32 %s57, 1
    %p61 = scmp.eq.s32.totalorder %s9, 1
    %p62 = scmp.ne.s32.totalorder %s57, %s59
    %p63 = scmp.eq.s32.totalorder %s9, 0
    %p64 = por %p62, %p63
    %p65 = scmp.ne.s32.totalorder %s57, %s59
    %p66 = scmp.eq.s32.totalorder %s14, 1
    %p67 = por %p65, %p66
    %p68 = scmp.ne.s32.totalorder %s59, %s60
    %p69 = scmp.eq.s32.totalorder %s14, 0
    %p70 = por %p68, %p69
    %p71 = scmp.ne.s32.totalorder %s59, %s60
    %p72 = scmp.eq.s32.totalorder %s15, 1
    %p73 = por %p71, %p72
    %p75 = scmp.ne.s32.totalorder %s60, %s74
    %p76 = scmp.eq.s32.totalorder %s15, 0
    %p77 = por %p75, %p76
    %s79 = sadd.s32 %s78, 1
    %p82 = scmp.eq.s32.totalorder %s9, 1
    %p83 = scmp.ne.s32.totalorder %s78, %s80
    %p84 = scmp.eq.s32.totalorder %s9, 0
    %p85 = por %p83, %p84
    %p86 = scmp.ne.s32.totalorder %s78, %s80
    %p87 = scmp.eq.s32.totalorder %s14, 1
    %p88 = por %p86, %p87
    %p89 = scmp.ne.s32.totalorder %s80, %s81
    %p90 = scmp.eq.s32.totalorder %s14, 0
    %p91 = por %p89, %p90
    %p92 = scmp.ne.s32.totalorder %s80, %s81
    %p93 = scmp.eq.s32.totalorder %s15, 1
    %p94 = por %p92, %p93
    %p96 = scmp.ne.s32.totalorder %s81, %s95
    %p97 = scmp.eq.s32.totalorder %s15, 0
    %p98 = por %p96, %p97
    %s99 = ssub.s32 %s16, %s28
    %s100 = ssub.s32 %s17, %s24
    %s101 = sor.u32 %s99, %s100
    %p102 = scmp.eq.s32.totalorder %s101, 0
    %s104 = sadd.s32 %s103, 1
    %s105 = scalar_select %p102, %s103, %s104
    %p108 = pneg %p102
    %p109 = scmp.eq.s32.totalorder %s9, 1
    %p110 = por %p108, %p109
    %p111 = scmp.ne.s32.totalorder %s103, %s106
    %p112 = scmp.eq.s32.totalorder %s9, 0
    %p113 = por %p111, %p112
    %p114 = scmp.ne.s32.totalorder %s103, %s106
    %p115 = scmp.eq.s32.totalorder %s14, 1
    %p116 = por %p114, %p115
    %p117 = scmp.ne.s32.totalorder %s106, %s107
    %p118 = scmp.eq.s32.totalorder %s14, 0
    %p119 = por %p117, %p118
    %p120 = scmp.ne.s32.totalorder %s106, %s107
    %p121 = scmp.eq.s32.totalorder %s15, 1
    %p122 = por %p120, %p121
    %p124 = scmp.ne.s32.totalorder %s107, %s123
    %p125 = scmp.eq.s32.totalorder %s15, 0
    %p126 = por %p124, %p125
    %p127 = scmp.le.s32.totalorder 1, %s9
    %p128 = scmp.lt.s32.totalorder %s9, 3
    %p129 = pnand %p127, %p128
    %p130 = pneg %p129
    // Predicated region
    $region9: #{dconv_block.3} parent=5 // pred_check
      _
    $region10: #{dconv_block.3} parent=5 // pred_check_branch
      %132 = sbr.rel (%p129) target = $region12
    $region11: #{dconv_block.3} parent=5 // pred_region
      %s133 = ssub.s32 %s9, 1
      // Predicated region
      $region13: #{dconv_block.3} parent=11 // pred_check
        %p134 = pneg %p70
      $region14: #{dconv_block.3} parent=11 // pred_check_branch
        %136 = sbr.rel (%p134) target = $region16
      $region15: #{dconv_block.3} parent=11 // pred_region
        _
      $region16: #{dconv_block.3} parent=11 // pred_fallthru
        _
      // Predicated region
      $region17: #{dconv_block.3} parent=11 // pred_check
        %p137 = pneg %p91
      $region18: #{dconv_block.3} parent=11 // pred_check_branch
        %139 = sbr.rel (%p137) target = $region20
      $region19: #{dconv_block.3} parent=11 // pred_region
        _
      $region20: #{dconv_block.3} parent=11 // pred_fallthru
        _
    $region12: #{dconv_block.3} parent=5 // pred_fallthru
      _
    %p140 = scmp.lt.s32.totalorder %s9, 2
    // Predicated region
    $region21: #{dconv_block.3} parent=5 // pred_check
      %p141 = pneg %p140
    $region22: #{dconv_block.3} parent=5 // pred_check_branch
      %143 = sbr.rel (%p141) target = $region24
    $region23: #{dconv_block.3} parent=5 // pred_region
      // Predicated region
      $region25: #{dconv_block.3} parent=23 // pred_check
        %p144 = pneg %p43
      $region26: #{dconv_block.3} parent=23 // pred_check_branch
        %146 = sbr.rel (%p144) target = $region28
      $region27: #{dconv_block.3} parent=23 // pred_region
        %s147 = smul.u32 16, %s17
        %p148 = scmp.lt.s32.totalorder %s16, 1
        %s149 = scalar_select %p148, %s16, 1
        %p150 = scmp.lt.s32.totalorder %s147, 15
        %s151 = scalar_select %p150, %s147, 15
        %s152 = smul.addr %s149, 16
        %s153 = sadd.s32 %s151, %s152
        %s154 = smul.addr %s153, 8
        %s155 = scalar_lea.vmem %s0, %s154
        %s156 = smul.u32 16, %s17
      $region28: #{dconv_block.3} parent=23 // pred_fallthru
        _
    $region24: #{dconv_block.3} parent=5 // pred_fallthru
      _
    %p157 = scmp.le.s32.totalorder 1, %s9
    %p158 = scmp.lt.s32.totalorder %s9, 3
    %p159 = pnand %p157, %p158
    %p160 = pneg %p159
    // Predicated region
    $region29: #{dconv_block.3} parent=5 // pred_check
      _
    $region30: #{dconv_block.3} parent=5 // pred_check_branch
      %162 = sbr.rel (%p159) target = $region32
    $region31: #{dconv_block.3} parent=5 // pred_region
      %s163 = ssub.s32 %s9, 1
      %s164 = smul.u32 16, %s19
      %p165 = scmp.lt.s32.totalorder %s18, 1
      %s166 = scalar_select %p165, %s18, 1
      %p167 = scmp.lt.s32.totalorder %s164, 15
      %s168 = scalar_select %p167, %s164, 15
      %s169 = smul.addr %s166, 16
      %s170 = sadd.s32 %s168, %s169
      %s171 = smul.addr %s170, 8
      %s172 = scalar_lea.vmem %s0, %s171
      %p173 = pneg %p49
      %p174 = pneg %p46
      %p175 = pneg %p70
      %p176 = pneg %p67
      %p177 = pneg %p91
      %p178 = pneg %p88
      %p179 = pneg %p119
      %p180 = pneg %p116
      %p181 = scmp.lt.s32.totalorder %s18, 1
      %s182 = scalar_select %p181, %s18, 1
      %p183 = scmp.lt.s32.totalorder %s19, 0
      %s184 = scalar_select %p183, %s19, 0
      %s185 = smul.addr %s182, 16
      %s186 = sadd.s32 %s184, %s185
      %s187 = smul.addr %s186, 8
      %s188 = scalar_lea.vmem %s3, %s187
      %s189 = smul.u32 16, %s19
      %p190 = scmp.lt.s32.totalorder %s18, 1
      %s191 = scalar_select %p190, %s18, 1
      %p192 = scmp.lt.s32.totalorder %s189, 15
      %s193 = scalar_select %p192, %s189, 15
      %s194 = smul.addr %s191, 16
      %s195 = sadd.s32 %s193, %s194
      %s196 = smul.addr %s195, 8
      %s197 = scalar_lea.vmem %s0, %s196
      %s198 = smul.u32 16, %s19
      %p199 = scmp.lt.s32.totalorder %s18, 1
      %s200 = scalar_select %p199, %s18, 1
      %p201 = scmp.lt.s32.totalorder %s19, 0
      %s202 = scalar_select %p201, %s19, 0
      %s203 = smul.addr %s200, 16
      %s204 = sadd.s32 %s202, %s203
      %s205 = smul.addr %s204, 8
      %s206 = scalar_lea.vmem %s3, %s205
      %v207 = vld [vmem:[%s197] sm:$0xff]
      %v208 = vld [vmem:[%s197 + $0x8] sm:$0xff]
      %v209 = vld [vmem:[%s197 + $0x10] sm:$0xff]
      %v210 = vld [vmem:[%s197 + $0x18] sm:$0xff]
      %v211 = vld [vmem:[%s197 + $0x20] sm:$0xff]
      %v212 = vld [vmem:[%s197 + $0x28] sm:$0xff]
      %v213 = vld [vmem:[%s197 + $0x30] sm:$0xff]
      %v214 = vld [vmem:[%s197 + $0x38] sm:$0xff]
      %v215 = vld [vmem:[%s197 + $0x40] sm:$0xff]
      %v216 = vld [vmem:[%s197 + $0x48] sm:$0xff]
      %v217 = vld [vmem:[%s197 + $0x50] sm:$0xff]
      %v218 = vld [vmem:[%s197 + $0x58] sm:$0xff]
      %v219 = vld [vmem:[%s197 + $0x60] sm:$0xff]
      %v220 = vld [vmem:[%s197 + $0x68] sm:$0xff]
      %v221 = vld [vmem:[%s197 + $0x70] sm:$0xff]
      %v222 = vld [vmem:[%s197 + $0x78] sm:$0xff]
      %v223 = vld [vmem:[%s1] sm:$0x1]
      %v225 = vperm.slane %v223, 0
      %v227 = vmul.f32 %v207, %v225
      %v228 = vmul.f32 %v208, %v225
      %v229 = vmul.f32 %v209, %v225
      %v230 = vmul.f32 %v210, %v225
      %v231 = vmul.f32 %v211, %v225
      %v232 = vmul.f32 %v212, %v225
      %v233 = vmul.f32 %v213, %v225
      %v234 = vmul.f32 %v214, %v225
      %v235 = vmul.f32 %v215, %v225
      %v236 = vmul.f32 %v216, %v225
      %v237 = vmul.f32 %v217, %v225
      %v238 = vmul.f32 %v218, %v225
      %v239 = vmul.f32 %v219, %v225
      %v240 = vmul.f32 %v220, %v225
      %v241 = vmul.f32 %v221, %v225
      %v242 = vmul.f32 %v222, %v225
      %v243 = vld [vmem:[%s2] sm:$0x1]
      %v245 = vperm.slane %v243, 0
      %v247 = vadd.f32 %v227, %v245
      %v248 = vadd.f32 %v228, %v245
      %v249 = vadd.f32 %v229, %v245
      %v250 = vadd.f32 %v230, %v245
      %v251 = vadd.f32 %v231, %v245
      %v252 = vadd.f32 %v232, %v245
      %v253 = vadd.f32 %v233, %v245
      %v254 = vadd.f32 %v234, %v245
      %v255 = vadd.f32 %v235, %v245
      %v256 = vadd.f32 %v236, %v245
      %v257 = vadd.f32 %v237, %v245
      %v258 = vadd.f32 %v238, %v245
      %v259 = vadd.f32 %v239, %v245
      %v260 = vadd.f32 %v240, %v245
      %v261 = vadd.f32 %v241, %v245
      %v262 = vadd.f32 %v242, %v245
      %vm263 = vcmp.gt.f32.partialorder %v247, 0.0
      %vm264 = vcmp.gt.f32.partialorder %v248, 0.0
      %vm265 = vcmp.gt.f32.partialorder %v249, 0.0
      %vm266 = vcmp.gt.f32.partialorder %v250, 0.0
      %vm267 = vcmp.gt.f32.partialorder %v251, 0.0
      %vm268 = vcmp.gt.f32.partialorder %v252, 0.0
      %vm269 = vcmp.gt.f32.partialorder %v253, 0.0
      %vm270 = vcmp.gt.f32.partialorder %v254, 0.0
      %vm271 = vcmp.gt.f32.partialorder %v255, 0.0
      %vm272 = vcmp.gt.f32.partialorder %v256, 0.0
      %vm273 = vcmp.gt.f32.partialorder %v257, 0.0
      %vm274 = vcmp.gt.f32.partialorder %v258, 0.0
      %vm275 = vcmp.gt.f32.partialorder %v259, 0.0
      %vm276 = vcmp.gt.f32.partialorder %v260, 0.0
      %vm277 = vcmp.gt.f32.partialorder %v261, 0.0
      %vm278 = vcmp.gt.f32.partialorder %v262, 0.0
      %v279 = vmul.f32 %v247, 0.2
      %v280 = vmul.f32 %v248, 0.2
      %v281 = vmul.f32 %v249, 0.2
      %v282 = vmul.f32 %v250, 0.2
      %v283 = vmul.f32 %v251, 0.2
      %v284 = vmul.f32 %v252, 0.2
      %v285 = vmul.f32 %v253, 0.2
      %v286 = vmul.f32 %v254, 0.2
      %v287 = vmul.f32 %v255, 0.2
      %v288 = vmul.f32 %v256, 0.2
      %v289 = vmul.f32 %v257, 0.2
      %v290 = vmul.f32 %v258, 0.2
      %v291 = vmul.f32 %v259, 0.2
      %v292 = vmul.f32 %v260, 0.2
      %v293 = vmul.f32 %v261, 0.2
      %v294 = vmul.f32 %v262, 0.2
      %v295 = vsel %vm263, %v247, %v279
      %v296 = vsel %vm264, %v248, %v280
      %v297 = vsel %vm265, %v249, %v281
      %v298 = vsel %vm266, %v250, %v282
      %v299 = vsel %vm267, %v251, %v283
      %v300 = vsel %vm268, %v252, %v284
      %v301 = vsel %vm269, %v253, %v285
      %v302 = vsel %vm270, %v254, %v286
      %v303 = vsel %vm271, %v255, %v287
      %v304 = vsel %vm272, %v256, %v288
      %v305 = vsel %vm273, %v257, %v289
      %v306 = vsel %vm274, %v258, %v290
      %v307 = vsel %vm275, %v259, %v291
      %v308 = vsel %vm276, %v260, %v292
      %v309 = vsel %vm277, %v261, %v293
      %v310 = vsel %vm278, %v262, %v294
      %311 = vxpose.xlu0.b32.start [1/16] %v295, 128
      %312 = vxpose.xlu0.b32.cont [2/16] %v296, 128
      %313 = vxpose.xlu0.b32.cont [3/16] %v297, 128
      %314 = vxpose.xlu0.b32.cont [4/16] %v298, 128
      %315 = vxpose.xlu0.b32.cont [5/16] %v299, 128
      %316 = vxpose.xlu0.b32.cont [6/16] %v300, 128
      %317 = vxpose.xlu0.b32.cont [7/16] %v301, 128
      %318 = vxpose.xlu0.b32.cont [8/16] %v302, 128
      %319 = vxpose.xlu0.b32.cont [9/16] %v303, 128
      %320 = vxpose.xlu0.b32.cont [10/16] %v304, 128
      %321 = vxpose.xlu0.b32.cont [11/16] %v305, 128
      %322 = vxpose.xlu0.b32.cont [12/16] %v306, 128
      %323 = vxpose.xlu0.b32.cont [13/16] %v307, 128
      %324 = vxpose.xlu0.b32.cont [14/16] %v308, 128
      %325 = vxpose.xlu0.b32.cont [15/16] %v309, 128
      %326 = vxpose.xlu0.b32.end [16/16] %v310, 128
      %v327 = vpop.trf.xlu0
      %v328 = vpop.trf.xlu0
      %v329 = vpop.trf.xlu0
      %v330 = vpop.trf.xlu0
      %v331 = vpop.trf.xlu0
      %v332 = vpop.trf.xlu0
      %v333 = vpop.trf.xlu0
      %v334 = vpop.trf.xlu0
      %v335 = vpop.trf.xlu0
      %v336 = vpop.trf.xlu0
      %v337 = vpop.trf.xlu0
      %v338 = vpop.trf.xlu0
      %v339 = vpop.trf.xlu0
      %v340 = vpop.trf.xlu0
      %v341 = vpop.trf.xlu0
      %v342 = vpop.trf.xlu0
      %343 = vst [vmem:[%s206] sm:$0xff] %v327
      %344 = vst [vmem:[%s206 + $0x8] sm:$0xff] %v328
      %345 = vst [vmem:[%s206 + $0x10] sm:$0xff] %v329
      %346 = vst [vmem:[%s206 + $0x18] sm:$0xff] %v330
      %347 = vst [vmem:[%s206 + $0x20] sm:$0xff] %v331
      %348 = vst [vmem:[%s206 + $0x28] sm:$0xff] %v332
      %349 = vst [vmem:[%s206 + $0x30] sm:$0xff] %v333
      %350 = vst [vmem:[%s206 + $0x38] sm:$0xff] %v334
      %351 = vst [vmem:[%s206 + $0x40] sm:$0xff] %v335
      %352 = vst [vmem:[%s206 + $0x48] sm:$0xff] %v336
      %353 = vst [vmem:[%s206 + $0x50] sm:$0xff] %v337
      %354 = vst [vmem:[%s206 + $0x58] sm:$0xff] %v338
      %355 = vst [vmem:[%s206 + $0x60] sm:$0xff] %v339
      %356 = vst [vmem:[%s206 + $0x68] sm:$0xff] %v340
      %357 = vst [vmem:[%s206 + $0x70] sm:$0xff] %v341
      %358 = vst [vmem:[%s206 + $0x78] sm:$0xff] %v342
      %p359 = scmp.lt.s32.totalorder %s18, 1
      %s360 = scalar_select %p359, %s18, 1
      %p361 = scmp.lt.s32.totalorder %s19, 0
      %s362 = scalar_select %p361, %s19, 0
      %s363 = smul.addr %s360, 16
      %s364 = sadd.s32 %s362, %s363
      %s365 = smul.addr %s364, 8
      %s366 = scalar_lea.vmem %s3, %s365
      // Predicated region
      $region33: #{dconv_block.3} parent=31 // pred_check
        %p367 = pneg %p116
      $region34: #{dconv_block.3} parent=31 // pred_check_branch
        %369 = sbr.rel (%p367) target = $region36
      $region35: #{dconv_block.3} parent=31 // pred_region
        _
      $region36: #{dconv_block.3} parent=31 // pred_fallthru
        _
    $region32: #{dconv_block.3} parent=5 // pred_fallthru
      _
    %p370 = scmp.le.s32.totalorder 2, %s9
    // Predicated region
    $region37: #{dconv_block.3} parent=5 // pred_check
      %p371 = pneg %p370
    $region38: #{dconv_block.3} parent=5 // pred_check_branch
      %373 = sbr.rel (%p371) target = $region40
    $region39: #{dconv_block.3} parent=5 // pred_region
      %s374 = ssub.s32 %s9, 2
      // Predicated region
      $region41: #{dconv_block.3} parent=39 // pred_check
        %p375 = pneg %p122
      $region42: #{dconv_block.3} parent=39 // pred_check_branch
        %377 = sbr.rel (%p375) target = $region44
      $region43: #{dconv_block.3} parent=39 // pred_region
        %p378 = scmp.lt.s32.totalorder %s20, 1
        %s379 = scalar_select %p378, %s20, 1
        %p380 = scmp.lt.s32.totalorder %s21, 0
        %s381 = scalar_select %p380, %s21, 0
        %s382 = smul.addr %s379, 16
        %s383 = sadd.s32 %s381, %s382
        %s384 = smul.addr %s383, 8
        %s385 = scalar_lea.vmem %s3, %s384
      $region44: #{dconv_block.3} parent=39 // pred_fallthru
        _
    $region40: #{dconv_block.3} parent=5 // pred_fallthru
      _
  $region6: #{dconv_block.3} parent=0 // loop_footer
    %s13 = sadd.s32 1, %s9
  $region7: #{dconv_block.3} parent=0 // loop_footer_branch
    %8 = sbr.rel target = $region3
  $region8: #{dconv_block.3} parent=0 // loop_exit
    _

// kernel: dconv_block.2
$region0: #{dconv_block.2}
  #allocation0 [shape = 'u32[]', space=smem, size = 0x4, offset = 0x4, fixed_abs, tag = 'smem constant byte address 0x4 - core index']
  #allocation1 [shape = 'u32[72,128]{1,0:T(1,128)}', space=vmem, size = 0x9000, scoped, tag = 'internal scratch']
  %s0 = inlined_call_operand.vmem [shape: f32[256,128], index: 0, kind: input, shape index: {}]
  %s1 = inlined_call_operand.vmem [shape: f32[128,128], index: 1, kind: input, shape index: {}]
  %s2 = inlined_call_operand.vmem [shape: f32[256,128], index: 2, kind: output, shape index: {0}]
  %s3 = inlined_call_operand.vmem [shape: f32[2,1,128], index: 3, kind: output, shape index: {1}]
  %s4 = inlined_call_operand.vmem [shape: f32[2,1,128], index: 4, kind: output, shape index: {2}]
  %5 = xla_tuple %s2, %s3, %s4
  %s6 = sld [smem:[#allocation0]]
  $region57: #{dconv_block.2} parent=0
    _
  %s8 = ssub.s32 1, %s6
  %s9 = scalar_select 0, %s8, %s6
  loop: start=0, step=1, limit=4
  $region2: #{dconv_block.2} parent=0 // loop_pre_header
    _
  $region3: #{dconv_block.2} parent=0 // loop_header
    %s11 = sphi 0, %s15
    %p12 = scmp.ge.s32.totalorder %s11, 4
    %s18 = sphi 0, %s30
    %s19 = sphi 0, %s26
    %s20 = sphi 0, %s18
    %s21 = sphi 0, %s19
    %s22 = sphi 0, %s20
    %s23 = sphi 0, %s21
    %s35 = sphi 0, %s37
    %s38 = sphi 0, %s35
    %s39 = sphi 0, %s38
    %s55 = sphi 0, %s39
    %s59 = sphi 0, %s59
    %s61 = sphi 0, %s59
    %s62 = sphi 0, %s61
    %s76 = sphi 0, %s62
    %s82 = sphi 0, %s84
    %s85 = sphi 0, %s82
    %s86 = sphi 0, %s85
    %s102 = sphi 0, %s86
    %s108 = sphi 0, %s110
    %s111 = sphi 0, %s108
    %s112 = sphi 0, %s111
    %s128 = sphi 0, %s112
    %s134 = sphi 0, %s136
    %s137 = sphi 0, %s134
    %s138 = sphi 0, %s137
    %s154 = sphi 0, %s138
  $region4: #{dconv_block.2} parent=0 // loop_header_branch
    %14 = sbr.rel (%p12) target = $region8
  $region5: #{dconv_block.2} parent=0 // loop_body
    %s16 = ssub.s32 %s11, 1
    %s17 = ssub.s32 %s11, 2
    %s24 = sadd.s32 1, %s19
    %p25 = scmp.ge.s32.totalorder %s24, 1
    %s26 = scalar_select %p25, 0, %s24
    %s27 = sadd.s32 1, %s18
    %s28 = scalar_select %p25, %s27, %s18
    %p29 = scmp.ge.s32.totalorder %s28, 2
    %s30 = scalar_select %p29, 0, %s28
    %s31 = ssub.s32 %s18, %s30
    %s32 = ssub.s32 %s19, %s26
    %s33 = sor.u32 %s31, %s32
    %p34 = scmp.eq.s32.totalorder %s33, 0
    %s36 = sadd.s32 %s35, 1
    %s37 = scalar_select %p34, %s35, %s36
    %p40 = pneg %p34
    %p41 = scmp.eq.s32.totalorder %s11, 1
    %p42 = por %p40, %p41
    %p43 = scmp.ne.s32.totalorder %s35, %s38
    %p44 = scmp.eq.s32.totalorder %s11, 0
    %p45 = por %p43, %p44
    %p46 = scmp.ne.s32.totalorder %s35, %s38
    %p47 = scmp.eq.s32.totalorder %s16, 1
    %p48 = por %p46, %p47
    %p49 = scmp.ne.s32.totalorder %s38, %s39
    %p50 = scmp.eq.s32.totalorder %s16, 0
    %p51 = por %p49, %p50
    %p52 = scmp.ne.s32.totalorder %s38, %s39
    %p53 = scmp.eq.s32.totalorder %s17, 1
    %p54 = por %p52, %p53
    %p56 = scmp.ne.s32.totalorder %s39, %s55
    %p57 = scmp.eq.s32.totalorder %s17, 0
    %p58 = por %p56, %p57
    %s60 = sadd.s32 %s59, 1
    %p63 = scmp.eq.s32.totalorder %s11, 1
    %p64 = scmp.ne.s32.totalorder %s59, %s61
    %p65 = scmp.eq.s32.totalorder %s11, 0
    %p66 = por %p64, %p65
    %p67 = scmp.ne.s32.totalorder %s59, %s61
    %p68 = scmp.eq.s32.totalorder %s16, 1
    %p69 = por %p67, %p68
    %p70 = scmp.ne.s32.totalorder %s61, %s62
    %p71 = scmp.eq.s32.totalorder %s16, 0
    %p72 = por %p70, %p71
    %p73 = scmp.ne.s32.totalorder %s61, %s62
    %p74 = scmp.eq.s32.totalorder %s17, 1
    %p75 = por %p73, %p74
    %p77 = scmp.ne.s32.totalorder %s62, %s76
    %p78 = scmp.eq.s32.totalorder %s17, 0
    %p79 = por %p77, %p78
    %s80 = ssub.s32 %s18, %s30
    %p81 = scmp.eq.s32.totalorder %s80, 0
    %s83 = sadd.s32 %s82, 1
    %s84 = scalar_select %p81, %s82, %s83
    %p87 = pneg %p81
    %p88 = scmp.eq.s32.totalorder %s11, 1
    %p89 = por %p87, %p88
    %p90 = scmp.ne.s32.totalorder %s82, %s85
    %p91 = scmp.eq.s32.totalorder %s11, 0
    %p92 = por %p90, %p91
    %p93 = scmp.ne.s32.totalorder %s82, %s85
    %p94 = scmp.eq.s32.totalorder %s16, 1
    %p95 = por %p93, %p94
    %p96 = scmp.ne.s32.totalorder %s85, %s86
    %p97 = scmp.eq.s32.totalorder %s16, 0
    %p98 = por %p96, %p97
    %p99 = scmp.ne.s32.totalorder %s85, %s86
    %p100 = scmp.eq.s32.totalorder %s17, 1
    %p101 = por %p99, %p100
    %p103 = scmp.ne.s32.totalorder %s86, %s102
    %p104 = scmp.eq.s32.totalorder %s17, 0
    %p105 = por %p103, %p104
    %s106 = ssub.s32 %s18, %s30
    %p107 = scmp.eq.s32.totalorder %s106, 0
    %s109 = sadd.s32 %s108, 1
    %s110 = scalar_select %p107, %s108, %s109
    %p113 = pneg %p107
    %p114 = scmp.eq.s32.totalorder %s11, 1
    %p115 = por %p113, %p114
    %p116 = scmp.ne.s32.totalorder %s108, %s111
    %p117 = scmp.eq.s32.totalorder %s11, 0
    %p118 = por %p116, %p117
    %p119 = scmp.ne.s32.totalorder %s108, %s111
    %p120 = scmp.eq.s32.totalorder %s16, 1
    %p121 = por %p119, %p120
    %p122 = scmp.ne.s32.totalorder %s111, %s112
    %p123 = scmp.eq.s32.totalorder %s16, 0
    %p124 = por %p122, %p123
    %p125 = scmp.ne.s32.totalorder %s111, %s112
    %p126 = scmp.eq.s32.totalorder %s17, 1
    %p127 = por %p125, %p126
    %p129 = scmp.ne.s32.totalorder %s112, %s128
    %p130 = scmp.eq.s32.totalorder %s17, 0
    %p131 = por %p129, %p130
    %s132 = ssub.s32 %s18, %s30
    %p133 = scmp.eq.s32.totalorder %s132, 0
    %s135 = sadd.s32 %s134, 1
    %s136 = scalar_select %p133, %s134, %s135
    %p139 = pneg %p133
    %p140 = scmp.eq.s32.totalorder %s11, 1
    %p141 = por %p139, %p140
    %p142 = scmp.ne.s32.totalorder %s134, %s137
    %p143 = scmp.eq.s32.totalorder %s11, 0
    %p144 = por %p142, %p143
    %p145 = scmp.ne.s32.totalorder %s134, %s137
    %p146 = scmp.eq.s32.totalorder %s16, 1
    %p147 = por %p145, %p146
    %p148 = scmp.ne.s32.totalorder %s137, %s138
    %p149 = scmp.eq.s32.totalorder %s16, 0
    %p150 = por %p148, %p149
    %p151 = scmp.ne.s32.totalorder %s137, %s138
    %p152 = scmp.eq.s32.totalorder %s17, 1
    %p153 = por %p151, %p152
    %p155 = scmp.ne.s32.totalorder %s138, %s154
    %p156 = scmp.eq.s32.totalorder %s17, 0
    %p157 = por %p155, %p156
    %p158 = scmp.le.s32.totalorder 1, %s11
    %p159 = scmp.lt.s32.totalorder %s11, 3
    %p160 = pnand %p158, %p159
    %p161 = pneg %p160
    // Predicated region
    $region9: #{dconv_block.2} parent=5 // pred_check
      _
    $region10: #{dconv_block.2} parent=5 // pred_check_branch
      %163 = sbr.rel (%p160) target = $region12
    $region11: #{dconv_block.2} parent=5 // pred_region
      %s164 = ssub.s32 %s11, 1
      // Predicated region
      $region13: #{dconv_block.2} parent=11 // pred_check
        %p165 = pneg %p72
      $region14: #{dconv_block.2} parent=11 // pred_check_branch
        %167 = sbr.rel (%p165) target = $region16
      $region15: #{dconv_block.2} parent=11 // pred_region
        _
      $region16: #{dconv_block.2} parent=11 // pred_fallthru
        _
    $region12: #{dconv_block.2} parent=5 // pred_fallthru
      _
    %p168 = scmp.lt.s32.totalorder %s11, 2
    // Predicated region
    $region17: #{dconv_block.2} parent=5 // pred_check
      %p169 = pneg %p168
    $region18: #{dconv_block.2} parent=5 // pred_check_branch
      %171 = sbr.rel (%p169) target = $region20
    $region19: #{dconv_block.2} parent=5 // pred_region
      // Predicated region
      $region21: #{dconv_block.2} parent=19 // pred_check
        %p172 = pneg %p45
      $region22: #{dconv_block.2} parent=19 // pred_check_branch
        %174 = sbr.rel (%p172) target = $region24
      $region23: #{dconv_block.2} parent=19 // pred_region
        %s175 = smul.u32 16, %s18
        %p176 = scmp.lt.s32.totalorder %s175, 31
        %s177 = scalar_select %p176, %s175, 31
        %p178 = scmp.lt.s32.totalorder %s19, 0
        %s179 = scalar_select %p178, %s19, 0
        %s180 = sadd.s32 %s179, %s177
        %s181 = smul.addr %s180, 8
        %s182 = scalar_lea.vmem %s0, %s181
        %s183 = smul.u32 16, %s18
      $region24: #{dconv_block.2} parent=19 // pred_fallthru
        _
    $region20: #{dconv_block.2} parent=5 // pred_fallthru
      _
    %p184 = scmp.le.s32.totalorder 1, %s11
    %p185 = scmp.lt.s32.totalorder %s11, 3
    %p186 = pnand %p184, %p185
    %p187 = pneg %p186
    // Predicated region
    $region25: #{dconv_block.2} parent=5 // pred_check
      _
    $region26: #{dconv_block.2} parent=5 // pred_check_branch
      %189 = sbr.rel (%p186) target = $region28
    $region27: #{dconv_block.2} parent=5 // pred_region
      %s190 = ssub.s32 %s11, 1
      %s191 = smul.u32 16, %s20
      %p192 = scmp.lt.s32.totalorder %s191, 31
      %s193 = scalar_select %p192, %s191, 31
      %p194 = scmp.lt.s32.totalorder %s21, 0
      %s195 = scalar_select %p194, %s21, 0
      %s196 = sadd.s32 %s195, %s193
      %s197 = smul.addr %s196, 8
      %s198 = scalar_lea.vmem %s0, %s197
      %p199 = pneg %p51
      %p200 = pneg %p48
      %p201 = pneg %p72
      %p202 = pneg %p69
      %p203 = pneg %p98
      %p204 = pneg %p95
      %s205 = smul.u32 16, %s20
      %p206 = scmp.lt.s32.totalorder %s205, 31
      %s207 = scalar_select %p206, %s205, 31
      %s208 = smul.addr %s207, 8
      %s209 = scalar_lea.vmem %s2, %s208
      %p210 = pneg %p124
      %p211 = pneg %p121
      %p212 = scmp.lt.s32.totalorder %s20, 1
      %s213 = scalar_select %p212, %s20, 1
      %s214 = scalar_lea.vmem %s3, %s213
      %p215 = pneg %p150
      %p216 = pneg %p147
      %p217 = scmp.lt.s32.totalorder %s20, 1
      %s218 = scalar_select %p217, %s20, 1
      %s219 = scalar_lea.vmem %s4, %s218
      %s220 = smul.u32 16, %s20
      %p221 = scmp.lt.s32.totalorder %s220, 31
      %s222 = scalar_select %p221, %s220, 31
      %p223 = scmp.lt.s32.totalorder %s21, 0
      %s224 = scalar_select %p223, %s21, 0
      %s225 = sadd.s32 %s224, %s222
      %s226 = smul.addr %s225, 8
      %s227 = scalar_lea.vmem %s0, %s226
      %s228 = smul.u32 16, %s20
      %s229 = smul.u32 16, %s20
      %p230 = scmp.lt.s32.totalorder %s229, 31
      %s231 = scalar_select %p230, %s229, 31
      %s232 = smul.addr %s231, 8
      %s233 = scalar_lea.vmem %s2, %s232
      %s234 = smul.u32 16, %s20
      %p235 = scmp.lt.s32.totalorder %s20, 1
      %s236 = scalar_select %p235, %s20, 1
      %s237 = scalar_lea.vmem %s3, %s236
      %p238 = scmp.lt.s32.totalorder %s20, 1
      %s239 = scalar_select %p238, %s20, 1
      %s240 = scalar_lea.vmem %s4, %s239
      %v241 = vld [vmem:[%s1] sm:$0xff]
      %v242 = vld [vmem:[%s1 + $0x8] sm:$0xff]
      %v243 = vld [vmem:[%s1 + $0x10] sm:$0xff]
      %v244 = vld [vmem:[%s1 + $0x18] sm:$0xff]
      %v245 = vld [vmem:[%s1 + $0x20] sm:$0xff]
      %v246 = vld [vmem:[%s1 + $0x28] sm:$0xff]
      %v247 = vld [vmem:[%s1 + $0x30] sm:$0xff]
      %v248 = vld [vmem:[%s1 + $0x38] sm:$0xff]
      %v249 = vld [vmem:[%s1 + $0x40] sm:$0xff]
      %v250 = vld [vmem:[%s1 + $0x48] sm:$0xff]
      %v251 = vld [vmem:[%s1 + $0x50] sm:$0xff]
      %v252 = vld [vmem:[%s1 + $0x58] sm:$0xff]
      %v253 = vld [vmem:[%s1 + $0x60] sm:$0xff]
      %v254 = vld [vmem:[%s1 + $0x68] sm:$0xff]
      %v255 = vld [vmem:[%s1 + $0x70] sm:$0xff]
      %v256 = vld [vmem:[%s1 + $0x78] sm:$0xff]
      %v257 = vld [vmem:[%s227] sm:$0xff]
      %v258 = vld [vmem:[%s227 + $0x8] sm:$0xff]
      %v259 = vld [vmem:[%s227 + $0x10] sm:$0xff]
      %v260 = vld [vmem:[%s227 + $0x18] sm:$0xff]
      %v261 = vld [vmem:[%s227 + $0x20] sm:$0xff]
      %v262 = vld [vmem:[%s227 + $0x28] sm:$0xff]
      %v263 = vld [vmem:[%s227 + $0x30] sm:$0xff]
      %v264 = vld [vmem:[%s227 + $0x38] sm:$0xff]
      %v265 = vld [vmem:[%s227 + $0x40] sm:$0xff]
      %v266 = vld [vmem:[%s227 + $0x48] sm:$0xff]
      %v267 = vld [vmem:[%s227 + $0x50] sm:$0xff]
      %v268 = vld [vmem:[%s227 + $0x58] sm:$0xff]
      %v269 = vld [vmem:[%s227 + $0x60] sm:$0xff]
      %v270 = vld [vmem:[%s227 + $0x68] sm:$0xff]
      %v271 = vld [vmem:[%s227 + $0x70] sm:$0xff]
      %v272 = vld [vmem:[%s227 + $0x78] sm:$0xff]
      %273 = vmatpush.msra.mxu0 %v256
      %274 = vmatpush.msra.mxu0 %v255
      %275 = vmatpush.msra.mxu0 %v254
      %276 = vmatpush.msra.mxu0 %v253
      %277 = vmatpush.msra.mxu0 %v252
      %278 = vmatpush.msra.mxu0 %v251
      %279 = vmatpush.msra.mxu0 %v250
      %280 = vmatpush.msra.mxu0 %v249
      %281 = vmatpush.msra.mxu0 %v248
      %282 = vmatpush.msra.mxu0 %v247
      %283 = vmatpush.msra.mxu0 %v246
      %284 = vmatpush.msra.mxu0 %v245
      %285 = vmatpush.msra.mxu0 %v244
      %286 = vmatpush.msra.mxu0 %v243
      %287 = vmatpush.msra.mxu0 %v242
      %288 = vmatpush.msra.mxu0 %v241
      %289 = vmatmul.f32.gmra.mxu0 %v257
      %v290 = vpop.f32.mrf.mxu0
      %v291 = vadd.f32 0.0, %v290
      %292 = vmatmul.f32.gmra.mxu0 %v258
      %v293 = vpop.f32.mrf.mxu0
      %v294 = vadd.f32 0.0, %v293
      %295 = vmatmul.f32.gmra.mxu0 %v259
      %v296 = vpop.f32.mrf.mxu0
      %v297 = vadd.f32 0.0, %v296
      %298 = vmatmul.f32.gmra.mxu0 %v260
      %v299 = vpop.f32.mrf.mxu0
      %v300 = vadd.f32 0.0, %v299
      %301 = vmatmul.f32.gmra.mxu0 %v261
      %v302 = vpop.f32.mrf.mxu0
      %v303 = vadd.f32 0.0, %v302
      %304 = vmatmul.f32.gmra.mxu0 %v262
      %v305 = vpop.f32.mrf.mxu0
      %v306 = vadd.f32 0.0, %v305
      %307 = vmatmul.f32.gmra.mxu0 %v263
      %v308 = vpop.f32.mrf.mxu0
      %v309 = vadd.f32 0.0, %v308
      %310 = vmatmul.f32.gmra.mxu0 %v264
      %v311 = vpop.f32.mrf.mxu0
      %v312 = vadd.f32 0.0, %v311
      %313 = vmatmul.f32.gmra.mxu0 %v265
      %v314 = vpop.f32.mrf.mxu0
      %v315 = vadd.f32 0.0, %v314
      %316 = vmatmul.f32.gmra.mxu0 %v266
      %v317 = vpop.f32.mrf.mxu0
      %v318 = vadd.f32 0.0, %v317
      %319 = vmatmul.f32.gmra.mxu0 %v267
      %v320 = vpop.f32.mrf.mxu0
      %v321 = vadd.f32 0.0, %v320
      %322 = vmatmul.f32.gmra.mxu0 %v268
      %v323 = vpop.f32.mrf.mxu0
      %v324 = vadd.f32 0.0, %v323
      %325 = vmatmul.f32.gmra.mxu0 %v269
      %v326 = vpop.f32.mrf.mxu0
      %v327 = vadd.f32 0.0, %v326
      %328 = vmatmul.f32.gmra.mxu0 %v270
      %v329 = vpop.f32.mrf.mxu0
      %v330 = vadd.f32 0.0, %v329
      %331 = vmatmul.f32.gmra.mxu0 %v271
      %v332 = vpop.f32.mrf.mxu0
      %v333 = vadd.f32 0.0, %v332
      %334 = vmatmul.f32.gmra.mxu0 %v272
      %v335 = vpop.f32.mrf.mxu0
      %v336 = vadd.f32 0.0, %v335
      %337 = vdwg.mxu0
      %338 = vst [vmem:[%s233] sm:$0xff] %v291
      %339 = vst [vmem:[%s233 + $0x8] sm:$0xff] %v294
      %340 = vst [vmem:[%s233 + $0x10] sm:$0xff] %v297
      %341 = vst [vmem:[%s233 + $0x18] sm:$0xff] %v300
      %342 = vst [vmem:[%s233 + $0x20] sm:$0xff] %v303
      %343 = vst [vmem:[%s233 + $0x28] sm:$0xff] %v306
      %344 = vst [vmem:[%s233 + $0x30] sm:$0xff] %v309
      %345 = vst [vmem:[%s233 + $0x38] sm:$0xff] %v312
      %346 = vst [vmem:[%s233 + $0x40] sm:$0xff] %v315
      %347 = vst [vmem:[%s233 + $0x48] sm:$0xff] %v318
      %348 = vst [vmem:[%s233 + $0x50] sm:$0xff] %v321
      %349 = vst [vmem:[%s233 + $0x58] sm:$0xff] %v324
      %350 = vst [vmem:[%s233 + $0x60] sm:$0xff] %v327
      %351 = vst [vmem:[%s233 + $0x68] sm:$0xff] %v330
      %352 = vst [vmem:[%s233 + $0x70] sm:$0xff] %v333
      %353 = vst [vmem:[%s233 + $0x78] sm:$0xff] %v336
      %v354 = vadd.f32 %v291, %v294
      %v355 = vadd.f32 %v354, %v297
      %v356 = vadd.f32 %v355, %v300
      %v357 = vadd.f32 %v356, %v303
      %v358 = vadd.f32 %v357, %v306
      %v359 = vadd.f32 %v358, %v309
      %v360 = vadd.f32 %v359, %v312
      %v361 = vadd.f32 %v360, %v315
      %v362 = vadd.f32 %v361, %v318
      %v363 = vadd.f32 %v362, %v321
      %v364 = vadd.f32 %v363, %v324
      %v365 = vadd.f32 %v364, %v327
      %v366 = vadd.f32 %v365, %v330
      %v367 = vadd.f32 %v366, %v333
      %v368 = vadd.f32 %v367, %v336
      %v369 = vrot.slane %v368, 4
      %v370 = vadd.f32 %v368, %v369
      %v371 = vrot.slane %v370, 2
      %v372 = vadd.f32 %v370, %v371
      %v373 = vrot.slane %v372, 1
      %v374 = vadd.f32 %v372, %v373
      %375 = vst [vmem:[%s237] sm:$0x1] %v374
      %v376 = vmul.f32 %v291, %v291
      %v377 = vmul.f32 %v294, %v294
      %v378 = vmul.f32 %v297, %v297
      %v379 = vmul.f32 %v300, %v300
      %v380 = vmul.f32 %v303, %v303
      %v381 = vmul.f32 %v306, %v306
      %v382 = vmul.f32 %v309, %v309
      %v383 = vmul.f32 %v312, %v312
      %v384 = vmul.f32 %v315, %v315
      %v385 = vmul.f32 %v318, %v318
      %v386 = vmul.f32 %v321, %v321
      %v387 = vmul.f32 %v324, %v324
      %v388 = vmul.f32 %v327, %v327
      %v389 = vmul.f32 %v330, %v330
      %v390 = vmul.f32 %v333, %v333
      %v391 = vmul.f32 %v336, %v336
      %v392 = vadd.f32 %v376, %v377
      %v393 = vadd.f32 %v392, %v378
      %v394 = vadd.f32 %v393, %v379
      %v395 = vadd.f32 %v394, %v380
      %v396 = vadd.f32 %v395, %v381
      %v397 = vadd.f32 %v396, %v382
      %v398 = vadd.f32 %v397, %v383
      %v399 = vadd.f32 %v398, %v384
      %v400 = vadd.f32 %v399, %v385
      %v401 = vadd.f32 %v400, %v386
      %v402 = vadd.f32 %v401, %v387
      %v403 = vadd.f32 %v402, %v388
      %v404 = vadd.f32 %v403, %v389
      %v405 = vadd.f32 %v404, %v390
      %v406 = vadd.f32 %v405, %v391
      %v407 = vrot.slane %v406, 4
      %v408 = vadd.f32 %v406, %v407
      %v409 = vrot.slane %v408, 2
      %v410 = vadd.f32 %v408, %v409
      %v411 = vrot.slane %v410, 1
      %v412 = vadd.f32 %v410, %v411
      %413 = vst [vmem:[%s240] sm:$0x1] %v412
      %s414 = smul.u32 16, %s20
      %p415 = scmp.lt.s32.totalorder %s414, 31
      %s416 = scalar_select %p415, %s414, 31
      %s417 = smul.addr %s416, 8
      %s418 = scalar_lea.vmem %s2, %s417
      %p419 = scmp.lt.s32.totalorder %s20, 1
      %s420 = scalar_select %p419, %s20, 1
      %s421 = scalar_lea.vmem %s3, %s420
      %p422 = scmp.lt.s32.totalorder %s20, 1
      %s423 = scalar_select %p422, %s20, 1
      %s424 = scalar_lea.vmem %s4, %s423
      // Predicated region
      $region29: #{dconv_block.2} parent=27 // pred_check
        %p425 = pneg %p95
      $region30: #{dconv_block.2} parent=27 // pred_check_branch
        %427 = sbr.rel (%p425) target = $region32
      $region31: #{dconv_block.2} parent=27 // pred_region
        %s428 = smul.u32 16, %s20
      $region32: #{dconv_block.2} parent=27 // pred_fallthru
        _
      // Predicated region
      $region33: #{dconv_block.2} parent=27 // pred_check
        %p429 = pneg %p121
      $region34: #{dconv_block.2} parent=27 // pred_check_branch
        %431 = sbr.rel (%p429) target = $region36
      $region35: #{dconv_block.2} parent=27 // pred_region
        _
      $region36: #{dconv_block.2} parent=27 // pred_fallthru
        _
      // Predicated region
      $region37: #{dconv_block.2} parent=27 // pred_check
        %p432 = pneg %p147
      $region38: #{dconv_block.2} parent=27 // pred_check_branch
        %434 = sbr.rel (%p432) target = $region40
      $region39: #{dconv_block.2} parent=27 // pred_region
        _
      $region40: #{dconv_block.2} parent=27 // pred_fallthru
        _
    $region28: #{dconv_block.2} parent=5 // pred_fallthru
      _
    %p435 = scmp.le.s32.totalorder 2, %s11
    // Predicated region
    $region41: #{dconv_block.2} parent=5 // pred_check
      %p436 = pneg %p435
    $region42: #{dconv_block.2} parent=5 // pred_check_branch
      %438 = sbr.rel (%p436) target = $region44
    $region43: #{dconv_block.2} parent=5 // pred_region
      %s439 = ssub.s32 %s11, 2
      // Predicated region
      $region45: #{dconv_block.2} parent=43 // pred_check
        %p440 = pneg %p101
      $region46: #{dconv_block.2} parent=43 // pred_check_branch
        %442 = sbr.rel (%p440) target = $region48
      $region47: #{dconv_block.2} parent=43 // pred_region
        %s443 = smul.u32 16, %s22
        %p444 = scmp.lt.s32.totalorder %s443, 31
        %s445 = scalar_select %p444, %s443, 31
        %s446 = smul.addr %s445, 8
        %s447 = scalar_lea.vmem %s2, %s446
      $region48: #{dconv_block.2} parent=43 // pred_fallthru
        _
      // Predicated region
      $region49: #{dconv_block.2} parent=43 // pred_check
        %p448 = pneg %p127
      $region50: #{dconv_block.2} parent=43 // pred_check_branch
        %450 = sbr.rel (%p448) target = $region52
      $region51: #{dconv_block.2} parent=43 // pred_region
        %p451 = scmp.lt.s32.totalorder %s22, 1
        %s452 = scalar_select %p451, %s22, 1
        %s453 = scalar_lea.vmem %s3, %s452
      $region52: #{dconv_block.2} parent=43 // pred_fallthru
        _
      // Predicated region
      $region53: #{dconv_block.2} parent=43 // pred_check
        %p454 = pneg %p153
      $region54: #{dconv_block.2} parent=43 // pred_check_branch
        %456 = sbr.rel (%p454) target = $region56
      $region55: #{dconv_block.2} parent=43 // pred_region
        %p457 = scmp.lt.s32.totalorder %s22, 1
        %s458 = scalar_select %p457, %s22, 1
        %s459 = scalar_lea.vmem %s4, %s458
      $region56: #{dconv_block.2} parent=43 // pred_fallthru
        _
    $region44: #{dconv_block.2} parent=5 // pred_fallthru
      _
  $region6: #{dconv_block.2} parent=0 // loop_footer
    %s15 = sadd.s32 1, %s11
  $region7: #{dconv_block.2} parent=0 // loop_footer_branch
    %10 = sbr.rel target = $region3
  $region8: #{dconv_block.2} parent=0 // loop_exit
    _

</llo_original>
